<compile_context>
chip_gen: v6e
topology: v6e:2x2x1
jax: 0.10.0
libtpu: 0.0.40
codegen_flags: <defaults>
</compile_context>

<pallas_src>
import math

import jax
import jax.numpy as jnp
import numpy as np
from jax.experimental import pallas as pl
from jax.experimental.pallas import tpu as pltpu

# ----------------------------------------------------------------------------
# Config (mirrors cfg['pose'] in the PyTorch module).
# ----------------------------------------------------------------------------
CFG = {
    "pose": {
        "layers_feat": [None, 32, 32, 32, 32, 3],  # li=0 in-dim forced to 11, last out-dim forced to 3
        "skip": [2],
        "max_index": 10,
    }
}
PE_L = 5
INPUT_T_DIM = 1 + 2 * PE_L          # 11 = raw index + sin/cos encoding


def get_layer_dims(layers):
    return list(zip(layers[:-1], layers[1:]))


def _round_up(x, m):
    return ((x + m - 1) // m) * m


def _cdiv(a, b):
    return -(-a // b)


# ----------------------------------------------------------------------------
# Deterministic parameter init (matches tensorflow_init_weights):
#   hidden layers: xavier_uniform (gain=1), zero bias
#   last layer:    uniform(0, 1e-6) weight, zero bias
# Weights stored PyTorch-style (k_out, k_in); bias (k_out,).
# ----------------------------------------------------------------------------
def init_params(cfg, key):
    L = get_layer_dims(cfg["pose"]["layers_feat"])
    skip = set(cfg["pose"]["skip"])
    params = []
    for li, (k_in, k_out) in enumerate(L):
        if li == 0:
            k_in = INPUT_T_DIM
        if li in skip:
            k_in += INPUT_T_DIM
        if li == len(L) - 1:
            k_out = 3
        key, wk = jax.random.split(key)
        if li == len(L) - 1:
            w = jax.random.uniform(wk, (k_out, k_in), jnp.float32, 0.0, 1e-6)
        else:
            limit = math.sqrt(6.0 / (k_in + k_out))
            w = jax.random.uniform(wk, (k_out, k_in), jnp.float32, -limit, limit)
        b = jnp.zeros((k_out,), jnp.float32)
        params.append((w, b))
    return params


# ----------------------------------------------------------------------------
# Pack everything tiny into two padded constant blocks (perf item 5).
#   cst (f32, [R1,128]): rows 0..10 cols 0/1/2 = coef/phase/sel of the fused PE;
#                        bias region (one column per layer); last-layer weight
#                        (padded to 8 rows, kept f32).
#   wgt (bf16 or f32, [R2,128]): hidden-layer weights; skip-layer main and skip
#                        parts share rows, different column ranges.
# ----------------------------------------------------------------------------
def _pack_constants_and_weights(params, cfg, use_bf16):
    skip = set(cfg["pose"]["skip"])
    in_dim = INPUT_T_DIM
    n_layers = len(params)
    w_dtype = jnp.bfloat16 if use_bf16 else jnp.float32

    layers = []
    wgt_rows = 0
    for li, (w, b) in enumerate(params):
        k_out, k_in = int(w.shape[0]), int(w.shape[1])
        has_skip = li in skip
        k_main = k_in - in_dim if has_skip else k_in
        is_last = li == n_layers - 1
        skip_col = _round_up(k_main, 8)
        assert skip_col + in_dim <= 128, "packed weight row exceeds 128 lanes"
        k_out_pad = _round_up(k_out, 8) if is_last else k_out   # perf item 6
        if is_last:
            row = None  # lives in the f32 block; filled below
        else:
            row = wgt_rows
            wgt_rows += _round_up(k_out, 16)   # bf16 (16,128) tile alignment
        layers.append(dict(row=row, k_out=k_out, k_out_pad=k_out_pad,
                           k_main=k_main, skip=has_skip, last=is_last,
                           skip_col=skip_col))
    wgt_rows = max(16, _round_up(wgt_rows, 16))

    bias_r0 = _round_up(in_dim, 8)
    bias_h = max(L["k_out_pad"] for L in layers)
    wlast_r0 = _round_up(bias_r0 + bias_h, 8)
    layers[-1]["row"] = wlast_r0
    cst_rows = _round_up(wlast_r0 + layers[-1]["k_out_pad"], 8)

    # Fused positional-encoding constants: pe = sel*t + (1-sel)*sin(coef*t+phase)
    freqs = (2.0 ** np.arange(PE_L, dtype=np.float64)) * np.pi
    coef = np.concatenate([[1.0], freqs, freqs]).astype(np.float32)
    phase = np.concatenate([np.zeros(1 + PE_L), np.full(PE_L, np.pi / 2.0)]).astype(np.float32)
    sel = np.zeros((in_dim,), np.float32)
    sel[0] = 1.0

    cst = jnp.zeros((cst_rows, 128), jnp.float32)
    cst = cst.at[0:in_dim, 0].set(jnp.asarray(coef))
    cst = cst.at[0:in_dim, 1].set(jnp.asarray(phase))
    cst = cst.at[0:in_dim, 2].set(jnp.asarray(sel))

    wgt = jnp.zeros((wgt_rows, 128), w_dtype)

    for li, ((w, b), L) in enumerate(zip(params, layers)):
        w = jnp.asarray(w, jnp.float32)
        b = jnp.asarray(b, jnp.float32)
        k_out, k_main, sc = L["k_out"], L["k_main"], L["skip_col"]
        cst = cst.at[bias_r0:bias_r0 + k_out, li].set(b)
        r = L["row"]
        if L["last"]:
            # last layer stays f32 (weights are O(1e-6)); rows 3..7 remain zero
            cst = cst.at[r:r + k_out, 0:k_main].set(w[:, :k_main])
            if L["skip"]:
                cst = cst.at[r:r + k_out, sc:sc + in_dim].set(w[:, k_main:])
        else:
            wgt = wgt.at[r:r + k_out, 0:k_main].set(w[:, :k_main].astype(w_dtype))
            if L["skip"]:
                wgt = wgt.at[r:r + k_out, sc:sc + in_dim].set(w[:, k_main:].astype(w_dtype))

    meta = dict(in_dim=in_dim, bias_r0=bias_r0, layers=layers, use_bf16=use_bf16)
    return cst, wgt, meta


# ----------------------------------------------------------------------------
# Pallas kernel: whole forward for one batch tile, batch on the lane axis.
# ----------------------------------------------------------------------------
def make_rotsnet_kernel(meta, max_index, min_index):
    in_dim = meta["in_dim"]
    bias_r0 = meta["bias_r0"]
    layers = meta["layers"]
    act_dtype = jnp.bfloat16 if meta["use_bf16"] else jnp.float32
    inv_range = 2.0 / (max_index - min_index)

    def kernel(cst_ref, wgt_ref, idx_ref, out_ref):
        t = inv_range * (idx_ref[...] - min_index) - 1.0          # (1, T) in [-1, 1]

        coef = cst_ref[0:in_dim, 0:1]
        phase = cst_ref[0:in_dim, 1:2]
        sel = cst_ref[0:in_dim, 2:3]
        # Fused PE, one transcendental: row0 -> t, rows 1..5 -> sin, 6..10 -> cos.
        pe = sel * t + (1.0 - sel) * jnp.sin(coef * t + phase)    # (11, T) f32
        pe_lo = pe.astype(act_dtype)

        feat = pe
        feat_lo = pe_lo
        for li, L in enumerate(layers):
            r, k_out, k_main, sc = L["row"], L["k_out"], L["k_main"], L["skip_col"]
            if L["last"]:
                rows = L["k_out_pad"]                              # 8 (padded, perf item 6)
                w = cst_ref[r:r + rows, 0:k_main]                  # f32
                b = cst_ref[bias_r0:bias_r0 + rows, li:li + 1]
                z = jnp.dot(w, feat, preferred_element_type=jnp.float32)
                if L["skip"]:
                    z = z + jnp.dot(cst_ref[r:r + rows, sc:sc + in_dim], pe,
                                    preferred_element_type=jnp.float32)
                out_ref[...] = z + b                               # (8, T) unmasked stores
            else:
                w = wgt_ref[r:r + k_out, 0:k_main]                 # bf16 (or f32)
                b = cst_ref[bias_r0:bias_r0 + k_out, li:li + 1]
                z = jnp.dot(w, feat_lo, preferred_element_type=jnp.float32)
                if L["skip"]:
                    z = z + jnp.dot(wgt_ref[r:r + k_out, sc:sc + in_dim], pe_lo,
                                    preferred_element_type=jnp.float32)
                feat = jnp.maximum(z + b, 0.0)                     # f32 bias + ReLU
                feat_lo = feat.astype(act_dtype)

    return kernel


# ----------------------------------------------------------------------------
# Wrapper: batch tiling (perf items 1-3, 7), BlockSpecs, layout handling.
# ----------------------------------------------------------------------------
def rotsnet_forward(index, params, cfg, *, tile_n_max=8192, use_bf16=True,
                    transpose_output=True):
    """index: any int/float array of frame indices.
    Returns (N, 3) if transpose_output else the lane-dense (3, N)."""
    idx = jnp.asarray(index).reshape(-1).astype(jnp.float32)
    N = int(idx.shape[0])
    max_index = float(cfg["pose"]["max_index"])
    min_index = 0.0

    cst, wgt, meta = _pack_constants_and_weights(params, cfg, use_bf16)
    k_out_last = meta["layers"][-1]["k_out"]
    k_out_pad = meta["layers"][-1]["k_out_pad"]

    # ---- batch tiling: N on lanes; waste bounded by ~128*n_blocks lanes -----
    n128 = _round_up(max(N, 1), 128)
    tile_cap = max(128, _round_up(int(tile_n_max), 128))
    n_blocks = _cdiv(n128, tile_cap)
    if n128 >= 1024 and n_blocks < 2:
        n_blocks = 2                       # v7x megacore: keep both TCs busy
    tile_n = _round_up(_cdiv(n128, n_blocks), 128)
    padded_n = tile_n * n_blocks
    idx_pad = jnp.pad(idx.reshape(1, -1), ((0, 0), (0, padded_n - N)))

    kernel = make_rotsnet_kernel(meta, max_index, min_index)

    in_specs = [
        pl.BlockSpec(cst.shape, lambda i: (0, 0)),      # resident f32 constants
        pl.BlockSpec(wgt.shape, lambda i: (0, 0)),      # resident (bf16) weights
        pl.BlockSpec((1, tile_n), lambda i: (0, i)),    # batch tile on lanes
    ]
    out_specs = pl.BlockSpec((k_out_pad, tile_n), lambda i: (0, i))

    out = pl.pallas_call(
        kernel,
        out_shape=jax.ShapeDtypeStruct((k_out_pad, padded_n), jnp.float32),
        grid=(n_blocks,),
        in_specs=in_specs,
        out_specs=out_specs,
        compiler_params=pltpu.CompilerParams(
            dimension_semantics=("parallel",),          # shard batch over TCs (v7x)
            vmem_limit_bytes=48 * 1024 * 1024,          # headroom; safe on 64 MiB/TC
        ),
    )(cst, wgt, idx_pad)

    out = out[:k_out_last, :N]                          # (3, N) lane-dense
    return out.T if transpose_output else out


# ----------------------------------------------------------------------------
# Pure-JAX reference (mirrors the PyTorch forward), HIGHEST-precision dots.
# ----------------------------------------------------------------------------
def rotsnet_reference(index, params, cfg):
    idx = jnp.asarray(index).reshape(-1, 1).astype(jnp.float32)
    max_index = float(cfg["pose"]["max_index"])
    x = 2.0 * (idx - 0.0) / (max_index - 0.0) - 1.0
    freq = (2.0 ** jnp.arange(PE_L, dtype=jnp.float32)) * jnp.pi
    spectrum = x[..., None] * freq                                     # (N, 1, L)
    enc = jnp.stack([jnp.sin(spectrum), jnp.cos(spectrum)], axis=-2)   # (N, 1, 2, L)
    enc = enc.reshape(x.shape[0], -1)                                  # (N, 2L)
    points_enc = jnp.concatenate([x, enc], axis=-1)                    # (N, 11)
    feat = points_enc
    skip = set(cfg["pose"]["skip"])
    for li, (w, b) in enumerate(params):
        if li in skip:
            feat = jnp.concatenate([feat, points_enc], axis=-1)
        feat = jnp.dot(feat, w.T, precision=jax.lax.Precision.HIGHEST) + b
        if li != len(params) - 1:
            feat = jax.nn.relu(feat)
    return feat


if __name__ == "__main__":
    key = jax.random.PRNGKey(0)
    pkey, ikey = jax.random.split(key)
    params = init_params(CFG, pkey)

    # Frame indices in [0, max_index], like the module's intended inputs.
    for n in (8, 1000):   # single-tile case and multi-block (megacore) case
        index = jax.random.uniform(ikey, (n,), jnp.float32,
                                   0.0, float(CFG["pose"]["max_index"]))
        ref = rotsnet_reference(index, params, CFG)

        # (a) all-f32 kernel path: tight structural check (cos-as-sin(x+pi/2)
        #     and MXU f32 pass differences keep it just under ~1e-4 rel).
        out_f32 = jax.block_until_ready(
            rotsnet_forward(index, params, CFG, use_bf16=False))
        assert out_f32.shape == (n, 3)
        np.testing.assert_allclose(np.asarray(out_f32), np.asarray(ref),
                                   rtol=2e-3, atol=1e-9)

        # (b) bf16-matmul production path: tolerance reflects bf16 quantization
        #     (~0.4%/layer); last layer dot stays f32.
        out_bf16 = jax.block_until_ready(
            rotsnet_forward(index, params, CFG, use_bf16=True))
        assert out_bf16.shape == (n, 3)
        np.testing.assert_allclose(np.asarray(out_bf16), np.asarray(ref),
                                   rtol=4e-2, atol=1e-7)

    print("KERNEL_OK")
</pallas_src>

<mosaic_0001>
module attributes {stable_mosaic.version = 11 : i64} {
  func.func @kernel(%arg0: i32, %arg1: memref<56x128xf32, #tpu.memory_space<vmem>>, %arg2: memref<128x128xf32, #tpu.memory_space<vmem>>, %arg3: memref<1x128xf32, #tpu.memory_space<vmem>>, %arg4: memref<8x128xf32, #tpu.memory_space<vmem>>) attributes {dimension_semantics = [#tpu.dimension_semantics<parallel>], iteration_bounds = array<i64: 1>, scalar_prefetch = 0 : i64, scratch_operands = 0 : i64, tpu.core_type = #tpu.core_type<tc>, window_params = [{pipeline_mode = #tpu.pipeline_mode<synchronous>, transform_indices = @transform_0, window_bounds = array<i64: 56, 128>}, {pipeline_mode = #tpu.pipeline_mode<synchronous>, transform_indices = @transform_1, window_bounds = array<i64: 128, 128>}, {transform_indices = @transform_2, window_bounds = array<i64: 1, 128>}, {transform_indices = @transform_3, window_bounds = array<i64: 8, 128>}]} {
    %c0 = arith.constant 0 : index
    %c0_0 = arith.constant 0 : index
    %0 = vector.load %arg3[%c0, %c0_0] : memref<1x128xf32, #tpu.memory_space<vmem>>, vector<1x128xf32>
    %cst = arith.constant 0.000000e+00 : f32
    %1 = vector.broadcast %cst : f32 to vector<1x128xf32>
    %2 = arith.subf %0, %1 : vector<1x128xf32>
    %cst_1 = arith.constant 2.000000e-01 : f32
    %3 = vector.broadcast %cst_1 : f32 to vector<1x128xf32>
    %4 = arith.mulf %3, %2 : vector<1x128xf32>
    %cst_2 = arith.constant 1.000000e+00 : f32
    %5 = vector.broadcast %cst_2 : f32 to vector<1x128xf32>
    %6 = arith.subf %4, %5 : vector<1x128xf32>
    %c0_3 = arith.constant 0 : index
    %c0_4 = arith.constant 0 : index
    %7 = vector.load %arg1[%c0_3, %c0_4] : memref<56x128xf32, #tpu.memory_space<vmem>>, vector<11x1xf32>
    %c0_5 = arith.constant 0 : index
    %c1 = arith.constant 1 : index
    %8 = vector.load %arg1[%c0_5, %c1] : memref<56x128xf32, #tpu.memory_space<vmem>>, vector<11x1xf32>
    %c0_6 = arith.constant 0 : index
    %c2 = arith.constant 2 : index
    %9 = vector.load %arg1[%c0_6, %c2] : memref<56x128xf32, #tpu.memory_space<vmem>>, vector<11x1xf32>
    %10 = vector.broadcast %9 : vector<11x1xf32> to vector<11x128xf32>
    %11 = vector.broadcast %6 : vector<1x128xf32> to vector<11x128xf32>
    %12 = arith.mulf %10, %11 : vector<11x128xf32>
    %cst_7 = arith.constant 1.000000e+00 : f32
    %13 = vector.broadcast %cst_7 : f32 to vector<11x1xf32>
    %14 = arith.subf %13, %9 : vector<11x1xf32>
    %15 = vector.broadcast %7 : vector<11x1xf32> to vector<11x128xf32>
    %16 = vector.broadcast %6 : vector<1x128xf32> to vector<11x128xf32>
    %17 = arith.mulf %15, %16 : vector<11x128xf32>
    %18 = vector.broadcast %8 : vector<11x1xf32> to vector<11x128xf32>
    %19 = arith.addf %17, %18 : vector<11x128xf32>
    %20 = math.sin %19 : vector<11x128xf32>
    %21 = vector.broadcast %14 : vector<11x1xf32> to vector<11x128xf32>
    %22 = arith.mulf %21, %20 : vector<11x128xf32>
    %23 = arith.addf %12, %22 : vector<11x128xf32>
    %c0_8 = arith.constant 0 : index
    %c0_9 = arith.constant 0 : index
    %24 = vector.load %arg2[%c0_8, %c0_9] : memref<128x128xf32, #tpu.memory_space<vmem>>, vector<32x11xf32>
    %c16 = arith.constant 16 : index
    %c0_10 = arith.constant 0 : index
    %25 = vector.load %arg1[%c16, %c0_10] : memref<56x128xf32, #tpu.memory_space<vmem>>, vector<32x1xf32>
    %cst_11 = arith.constant dense<0.000000e+00> : vector<32x128xf32>
    %26 = tpu.matmul %24, %23, %cst_11 {dimension_numbers = #tpu.dot_dimension_numbers<[1], [0], [0], [1], [0, 0, 1, 1], [], []>} : vector<32x11xf32>, vector<11x128xf32>, vector<32x128xf32> -> vector<32x128xf32>
    %27 = vector.broadcast %25 : vector<32x1xf32> to vector<32x128xf32>
    %28 = arith.addf %26, %27 : vector<32x128xf32>
    %cst_12 = arith.constant 0.000000e+00 : f32
    %29 = vector.broadcast %cst_12 : f32 to vector<32x128xf32>
    %30 = arith.maximumf %28, %29 : vector<32x128xf32>
    %c32 = arith.constant 32 : index
    %c0_13 = arith.constant 0 : index
    %31 = vector.load %arg2[%c32, %c0_13] : memref<128x128xf32, #tpu.memory_space<vmem>>, vector<32x32xf32>
    %c16_14 = arith.constant 16 : index
    %c1_15 = arith.constant 1 : index
    %32 = vector.load %arg1[%c16_14, %c1_15] : memref<56x128xf32, #tpu.memory_space<vmem>>, vector<32x1xf32>
    %cst_16 = arith.constant dense<0.000000e+00> : vector<32x128xf32>
    %33 = tpu.matmul %31, %30, %cst_16 {dimension_numbers = #tpu.dot_dimension_numbers<[1], [0], [0], [1], [0, 0, 1, 1], [], []>} : vector<32x32xf32>, vector<32x128xf32>, vector<32x128xf32> -> vector<32x128xf32>
    %34 = vector.broadcast %32 : vector<32x1xf32> to vector<32x128xf32>
    %35 = arith.addf %33, %34 : vector<32x128xf32>
    %cst_17 = arith.constant 0.000000e+00 : f32
    %36 = vector.broadcast %cst_17 : f32 to vector<32x128xf32>
    %37 = arith.maximumf %35, %36 : vector<32x128xf32>
    %c64 = arith.constant 64 : index
    %c0_18 = arith.constant 0 : index
    %38 = vector.load %arg2[%c64, %c0_18] : memref<128x128xf32, #tpu.memory_space<vmem>>, vector<32x32xf32>
    %c16_19 = arith.constant 16 : index
    %c2_20 = arith.constant 2 : index
    %39 = vector.load %arg1[%c16_19, %c2_20] : memref<56x128xf32, #tpu.memory_space<vmem>>, vector<32x1xf32>
    %cst_21 = arith.constant dense<0.000000e+00> : vector<32x128xf32>
    %40 = tpu.matmul %38, %37, %cst_21 {dimension_numbers = #tpu.dot_dimension_numbers<[1], [0], [0], [1], [0, 0, 1, 1], [], []>} : vector<32x32xf32>, vector<32x128xf32>, vector<32x128xf32> -> vector<32x128xf32>
    %c64_22 = arith.constant 64 : index
    %c32_23 = arith.constant 32 : index
    %41 = vector.load %arg2[%c64_22, %c32_23] : memref<128x128xf32, #tpu.memory_space<vmem>>, vector<32x11xf32>
    %cst_24 = arith.constant dense<0.000000e+00> : vector<32x128xf32>
    %42 = tpu.matmul %41, %23, %cst_24 {dimension_numbers = #tpu.dot_dimension_numbers<[1], [0], [0], [1], [0, 0, 1, 1], [], []>} : vector<32x11xf32>, vector<11x128xf32>, vector<32x128xf32> -> vector<32x128xf32>
    %43 = arith.addf %40, %42 : vector<32x128xf32>
    %44 = vector.broadcast %39 : vector<32x1xf32> to vector<32x128xf32>
    %45 = arith.addf %43, %44 : vector<32x128xf32>
    %cst_25 = arith.constant 0.000000e+00 : f32
    %46 = vector.broadcast %cst_25 : f32 to vector<32x128xf32>
    %47 = arith.maximumf %45, %46 : vector<32x128xf32>
    %c96 = arith.constant 96 : index
    %c0_26 = arith.constant 0 : index
    %48 = vector.load %arg2[%c96, %c0_26] : memref<128x128xf32, #tpu.memory_space<vmem>>, vector<32x32xf32>
    %c16_27 = arith.constant 16 : index
    %c3 = arith.constant 3 : index
    %49 = vector.load %arg1[%c16_27, %c3] : memref<56x128xf32, #tpu.memory_space<vmem>>, vector<32x1xf32>
    %cst_28 = arith.constant dense<0.000000e+00> : vector<32x128xf32>
    %50 = tpu.matmul %48, %47, %cst_28 {dimension_numbers = #tpu.dot_dimension_numbers<[1], [0], [0], [1], [0, 0, 1, 1], [], []>} : vector<32x32xf32>, vector<32x128xf32>, vector<32x128xf32> -> vector<32x128xf32>
    %51 = vector.broadcast %49 : vector<32x1xf32> to vector<32x128xf32>
    %52 = arith.addf %50, %51 : vector<32x128xf32>
    %cst_29 = arith.constant 0.000000e+00 : f32
    %53 = vector.broadcast %cst_29 : f32 to vector<32x128xf32>
    %54 = arith.maximumf %52, %53 : vector<32x128xf32>
    %c48 = arith.constant 48 : index
    %c0_30 = arith.constant 0 : index
    %55 = vector.load %arg1[%c48, %c0_30] : memref<56x128xf32, #tpu.memory_space<vmem>>, vector<8x32xf32>
    %c16_31 = arith.constant 16 : index
    %c4 = arith.constant 4 : index
    %56 = vector.load %arg1[%c16_31, %c4] : memref<56x128xf32, #tpu.memory_space<vmem>>, vector<8x1xf32>
    %cst_32 = arith.constant dense<0.000000e+00> : vector<8x128xf32>
    %57 = tpu.matmul %55, %54, %cst_32 {dimension_numbers = #tpu.dot_dimension_numbers<[1], [0], [0], [1], [0, 0, 1, 1], [], []>} : vector<8x32xf32>, vector<32x128xf32>, vector<8x128xf32> -> vector<8x128xf32>
    %58 = vector.broadcast %56 : vector<8x1xf32> to vector<8x128xf32>
    %59 = arith.addf %57, %58 : vector<8x128xf32>
    %c0_33 = arith.constant 0 : index
    %c0_34 = arith.constant 0 : index
    %60 = vector.load %arg4[%c0_33, %c0_34] : memref<8x128xf32, #tpu.memory_space<vmem>>, vector<8x128xf32>
    tpu.vector_store %arg4[%c0_33, %c0_34], %59 {strides = array<i32>} : memref<8x128xf32, #tpu.memory_space<vmem>>, vector<8x128xf32>,
    return
  }
  func.func @transform_0(%arg0: i32) -> (i32, i32) {
    %c0_i32 = arith.constant 0 : i32
    %c0_i32_0 = arith.constant 0 : i32
    %c0_i32_1 = arith.constant 0 : i32
    return %c0_i32, %c0_i32_0 : i32, i32
  }
  func.func @transform_1(%arg0: i32) -> (i32, i32) {
    %c0_i32 = arith.constant 0 : i32
    %c0_i32_0 = arith.constant 0 : i32
    %c0_i32_1 = arith.constant 0 : i32
    return %c0_i32, %c0_i32_0 : i32, i32
  }
  func.func @transform_2(%arg0: i32) -> (i32, i32) {
    %c0_i32 = arith.constant 0 : i32
    %c0_i32_0 = arith.constant 0 : i32
    return %c0_i32, %arg0 : i32, i32
  }
  func.func @transform_3(%arg0: i32) -> (i32, i32) {
    %c0_i32 = arith.constant 0 : i32
    %c0_i32_0 = arith.constant 0 : i32
    return %c0_i32, %arg0 : i32, i32
  }
}

</mosaic_0001>

<llo_original>
// kernel: tpu_custom_call.1
$region0: #{tpu_custom_call.1}
  #allocation0 [shape = 'u32[]', space=smem, size = 0x4, offset = 0x4, fixed_abs, tag = 'smem constant byte address 0x4 - core index']
  #allocation1 [shape = 'u32[144,128]{1,0:T(1,128)}', space=vmem, size = 0x12000, scoped, tag = 'internal scratch']
  %s0 = inlined_call_operand.hbm [shape: f32[56,128], index: 0, kind: input, shape index: {}]
  %s1 = inlined_call_operand.hbm [shape: f32[128,128], index: 1, kind: input, shape index: {}]
  %s2 = inlined_call_operand.vmem [shape: f32[1,128], index: 2, kind: input, shape index: {}]
  %s3 = inlined_call_operand.hbm [shape: f32[8,128], index: 3, kind: output, shape index: {}]
  %s4 = sld [smem:[#allocation0]]
  $region30: #{tpu_custom_call.1} parent=0
    _
  %s6 = ssub.s32 1, %s4
  %s7 = scalar_select 0, %s6, %s4
  $region1: #{tpu_custom_call.1} parent=0
    #allocation2 [shape = 'u8[28672]{0}', space=vmem, size = 0x7000, scoped, tag = 'input window, operand 0, single buffered']
    #allocation3 [shape = 's32[1]{0}', space=sflag, size = 0x4, scoped, tag = 'scoped memory for tpu_custom_call.1']
    #allocation4 [shape = 's32[1]{0}', space=sflag, size = 0x4, scoped, tag = 'scoped memory for tpu_custom_call.1']
    #allocation5 [shape = 'u8[65536]{0}', space=vmem, size = 0x10000, scoped, tag = 'input window, operand 1, single buffered']
    #allocation6 [shape = 's32[1]{0}', space=sflag, size = 0x4, scoped, tag = 'scoped memory for tpu_custom_call.1']
    #allocation7 [shape = 'u8[4096]{0}', space=vmem, size = 0x1000, scoped, tag = 'output window, operand 0, single buffered']
    %8 = vsyncpa [#allocation3], 0
    %9 = vsyncpa [#allocation6], 0
    %10 = vsyncpa [#allocation4], 0
    // Predicated region
    $region2: #{tpu_custom_call.1} parent=1 // pred_check
      _
    $region3: #{tpu_custom_call.1} parent=1 // pred_check_branch
      %12 = sbr.rel (0) target = $region5
    $region4: #{tpu_custom_call.1} parent=1 // pred_region
      %s14 = ssub.s32 896, 896
      %15 = vsyncadd [#allocation3], %s14
      %s16 = sshll.u32 [#allocation2], 4
      %s17 = int_to_ptr.vmem [resolvable:$true] %s16
      %22 = dma.hbm_to_vmem [thread:$0]  %s0, 896, %s17, [#allocation3], 128, 128, 8
    $region5: #{tpu_custom_call.1} parent=1 // pred_fallthru
      _
    // Predicated region
    $region6: #{tpu_custom_call.1} parent=1 // pred_check
      _
    $region7: #{tpu_custom_call.1} parent=1 // pred_check_branch
      %24 = sbr.rel (0) target = $region9
    $region8: #{tpu_custom_call.1} parent=1 // pred_region
      %s26 = ssub.s32 2048, 2048
      %27 = vsyncadd [#allocation6], %s26
      %s28 = sshll.u32 [#allocation5], 4
      %s29 = int_to_ptr.vmem [resolvable:$true] %s28
      %34 = dma.hbm_to_vmem [thread:$0]  %s1, 2048, %s29, [#allocation6], 128, 128, 8
    $region9: #{tpu_custom_call.1} parent=1 // pred_fallthru
      _
    // Predicated region
    $region10: #{tpu_custom_call.1} parent=1 // pred_check
      _
    $region11: #{tpu_custom_call.1} parent=1 // pred_check_branch
      %36 = sbr.rel (0) target = $region13
    $region12: #{tpu_custom_call.1} parent=1 // pred_region
      _
    $region13: #{tpu_custom_call.1} parent=1 // pred_fallthru
      _
    // Predicated region
    $region14: #{tpu_custom_call.1} parent=1 // pred_check
      _
    $region15: #{tpu_custom_call.1} parent=1 // pred_check_branch
      %38 = sbr.rel (0) target = $region17
    $region16: #{tpu_custom_call.1} parent=1 // pred_region
      %39 = dma.done [#allocation3], 896
    $region17: #{tpu_custom_call.1} parent=1 // pred_fallthru
      _
    // Predicated region
    $region18: #{tpu_custom_call.1} parent=1 // pred_check
      _
    $region19: #{tpu_custom_call.1} parent=1 // pred_check_branch
      %41 = sbr.rel (0) target = $region21
    $region20: #{tpu_custom_call.1} parent=1 // pred_region
      %42 = dma.done [#allocation6], 2048
    $region21: #{tpu_custom_call.1} parent=1 // pred_fallthru
      _
    %v43 = vld [vmem:[%s2] sm:$0x1]
    %v44 = vmul.f32 %v43, 0.2
    %v45 = vsub.f32 %v44, 1.0
    %v46 = vld [vmem:[#allocation2] sm:$0xff]
    %v47 = vld [vmem:[#allocation2 + $0x8] sm:$0x7]
    %49 = vset.pattern.permute.xlu0 2
    %50 = vperm.xlu0 %49, %v46
    %v51 = vpop.permute.xlu0 %50
    %54 = vset.pattern.permute.xlu0 2
    %55 = vperm.xlu0 %54, %v47
    %v56 = vpop.permute.xlu0 %55
    %v59 = vlaneseq
    %v60 = vshrl.u32 %v59, 7
    %v61 = vsub.s32 0, %v60
    %v62 = vrot.slane %v45, %v61
    %v64 = vmul.f32 %v51, %v62
    %v65 = vmul.f32 %v56, %v62
    %v66 = vsub.f32 1.0, %v46
    %v67 = vsub.f32 1.0, %v47
    %68 = vset.pattern.permute.xlu0 0
    %69 = vperm.xlu0 %68, %v46
    %v70 = vpop.permute.xlu0 %69
    %72 = vset.pattern.permute.xlu0 0
    %73 = vperm.xlu0 %72, %v47
    %v74 = vpop.permute.xlu0 %73
    %v76 = vmul.f32 %v70, %v62
    %v77 = vmul.f32 %v74, %v62
    %78 = vset.pattern.permute.xlu0 1
    %79 = vperm.xlu0 %78, %v46
    %v80 = vpop.permute.xlu0 %79
    %82 = vset.pattern.permute.xlu0 1
    %83 = vperm.xlu0 %82, %v47
    %v84 = vpop.permute.xlu0 %83
    %v86 = vadd.f32 %v76, %v80
    %v87 = vadd.f32 %v77, %v84
    %v88 = vand.u32 2147483647, %v86
    %vm89 = vcmp.le.f32.partialorder %v88, 0.7853982
    %vm90 = vcmp.lt.s32.totalorder %v86, 0
    %v91 = vand.u32 %v86, 2139095040
    %v92 = vshrl.u32 %v91, 23
    %v93 = vsub.s32 %v92, 127
    %v94 = vand.u32 2147483647, %v86
    %v95 = vand.u32 %v94, 8388607
    %v96 = vor.u32 %v95, 8388608
    %v97 = vsub.s32 0, %v96
    %v98 = vadd.s32 %v93, 1
    %vm99 = vcmp.gt.s32.totalorder %v98, 0
    %v100 = vsel %vm99, %v98, 0
    %v101 = vshrl.u32 %v100, 5
    %v102 = vand.u32 %v100, 31
    %v103 = vsub.s32 32, %v102
    %v104 = vshrl.u32 683565275, %v103
    %v105 = vshll.u32 683565275, %v102
    %v106 = vshrl.u32 2475754826, %v103
    %v107 = vor.u32 %v105, %v106
    %v108 = vshll.u32 2475754826, %v102
    %v109 = vshrl.u32 2131351028, %v103
    %v110 = vor.u32 %v108, %v109
    %v111 = vshll.u32 2131351028, %v102
    %v112 = vshrl.u32 2102212464, %v103
    %v113 = vor.u32 %v111, %v112
    %v114 = vshll.u32 2102212464, %v102
    %v115 = vshrl.u32 920167782, %v103
    %v116 = vor.u32 %v114, %v115
    %v117 = vshll.u32 920167782, %v102
    %v118 = vshrl.u32 1326507024, %v103
    %v119 = vor.u32 %v117, %v118
    %vm120 = vcmp.lt.s32.totalorder %v101, 1
    %vm121 = vcmp.lt.s32.totalorder %v101, 2
    %vm122 = vcmp.lt.s32.totalorder %v101, 3
    %vm123 = vcmp.lt.s32.totalorder %v101, 4
    %v124 = vsel %vm120, %v104, %v107
    %v125 = vsel %vm123, %v113, 2102212464
    %v126 = vsel %vm122, %v110, %v125
    %v127 = vsel %vm121, %v124, %v126
    %v128 = vsel %vm120, %v107, %v110
    %v129 = vsel %vm123, %v116, 920167782
    %v130 = vsel %vm122, %v113, %v129
    %v131 = vsel %vm121, %v128, %v130
    %v132 = vsel %vm120, %v110, %v113
    %v133 = vsel %vm123, %v119, 1326507024
    %v134 = vsel %vm122, %v116, %v133
    %v135 = vsel %vm121, %v132, %v134
    %v136 = vshll.u32 %v96, 8
    %v137 = vmul.u32.u64.compose %v136, %v135
    %v138 = vextract.low.u32 %v137
    %v139 = vextract.high.u32 %v137
    %v140 = vmul.u32.u64.compose %v136, %v131
    %v141 = vextract.low.u32 %v140
    %v142 = vextract.high.u32 %v140
    %v143 = vmul.u32 %v136, %v127
    %v144 = vadd.s32 %v139, %v141
    %vm145 = vc.u32 %v139, %v141
    %v146 = vadd.s32 %v142, 1
    %v147 = vsel %vm145, %v146, %v142
    %v148 = vadd.s32 %v143, %v147
    %v149 = vadd.s32 %v148, 536870912
    %v150 = vshrl.u32 %v149, 30
    %v151 = vshll.u32 %v150, 30
    %v152 = vsub.s32 %v148, %v151
    %vm153 = vcmp.lt.s32.totalorder %v152, 0
    %v154 = vsub.s32 0, %v152
    %v155 = vsel %vm153, %v154, %v152
    %v156 = vclz %v155
    %v157 = vsub.s32 %v156, 2
    %vm158 = vcmp.gt.s32.totalorder 0, %v157
    %v159 = vsel %vm158, 0, %v157
    %v160 = vsub.s32 32, %v159
    %v161 = vshll.u32 %v152, %v159
    %v162 = vshrl.u32 %v144, %v160
    %v163 = vor.u32 %v161, %v162
    %v164 = vsub.s32 4294967266, %v159
    %v165 = vadd.s32 %v164, 127
    %v166 = vshll.u32 %v165, 23
    %v167 = vor.u32 4788187, %v166
    %v168 = vand.u32 2147483647, %v167
    %v170 = vcvt.s32.f32 %v163
    %v171 = vmul.f32 %v170, %v168
    %v172 = vxor.u32 %v171, 2147483648
    %v173 = vsel %vm90, %v172, %v171
    %v174 = vsub.s32 4, %v150
    %v175 = vsel %vm90, %v174, %v150
    %v176 = vsel %vm89, %v86, %v173
    %v177 = vsel %vm89, 0, %v175
    %v178 = vcosq.f32.pop %v176
    %v179 = vsinq.f32.pop %v176
    %vm180 = vweird.f32 %v86
    %v181 = vadd.s32 %v177, 3
    %v182 = vand.u32 %v181, 3
    %vm183 = vcmp.lt.s32.totalorder %v182, 2
    %vm184 = vcmp.eq.s32.totalorder %v182, 0
    %v185 = vxor.u32 %v179, 2147483648
    %v186 = vsel %vm184, %v178, %v185
    %vm187 = vcmp.eq.s32.totalorder %v182, 2
    %v188 = vxor.u32 %v178, 2147483648
    %v189 = vsel %vm187, %v188, %v179
    %v190 = vsel %vm183, %v186, %v189
    %v191 = vsel %vm180, nan, %v190
    %v192 = vand.u32 2147483647, %v87
    %vm193 = vcmp.le.f32.partialorder %v192, 0.7853982
    %vm194 = vcmp.lt.s32.totalorder %v87, 0
    %v195 = vand.u32 %v87, 2139095040
    %v196 = vshrl.u32 %v195, 23
    %v197 = vsub.s32 %v196, 127
    %v198 = vand.u32 2147483647, %v87
    %v199 = vand.u32 %v198, 8388607
    %v200 = vor.u32 %v199, 8388608
    %v201 = vsub.s32 0, %v200
    %v202 = vadd.s32 %v197, 1
    %vm203 = vcmp.gt.s32.totalorder %v202, 0
    %v204 = vsel %vm203, %v202, 0
    %v205 = vshrl.u32 %v204, 5
    %v206 = vand.u32 %v204, 31
    %v207 = vsub.s32 32, %v206
    %v208 = vshrl.u32 683565275, %v207
    %v209 = vshll.u32 683565275, %v206
    %v210 = vshrl.u32 2475754826, %v207
    %v211 = vor.u32 %v209, %v210
    %v212 = vshll.u32 2475754826, %v206
    %v213 = vshrl.u32 2131351028, %v207
    %v214 = vor.u32 %v212, %v213
    %v215 = vshll.u32 2131351028, %v206
    %v216 = vshrl.u32 2102212464, %v207
    %v217 = vor.u32 %v215, %v216
    %v218 = vshll.u32 2102212464, %v206
    %v219 = vshrl.u32 920167782, %v207
    %v220 = vor.u32 %v218, %v219
    %v221 = vshll.u32 920167782, %v206
    %v222 = vshrl.u32 1326507024, %v207
    %v223 = vor.u32 %v221, %v222
    %vm224 = vcmp.lt.s32.totalorder %v205, 1
    %vm225 = vcmp.lt.s32.totalorder %v205, 2
    %vm226 = vcmp.lt.s32.totalorder %v205, 3
    %vm227 = vcmp.lt.s32.totalorder %v205, 4
    %v228 = vsel %vm224, %v208, %v211
    %v229 = vsel %vm227, %v217, 2102212464
    %v230 = vsel %vm226, %v214, %v229
    %v231 = vsel %vm225, %v228, %v230
    %v232 = vsel %vm224, %v211, %v214
    %v233 = vsel %vm227, %v220, 920167782
    %v234 = vsel %vm226, %v217, %v233
    %v235 = vsel %vm225, %v232, %v234
    %v236 = vsel %vm224, %v214, %v217
    %v237 = vsel %vm227, %v223, 1326507024
    %v238 = vsel %vm226, %v220, %v237
    %v239 = vsel %vm225, %v236, %v238
    %v240 = vshll.u32 %v200, 8
    %v241 = vmul.u32.u64.compose %v240, %v239
    %v242 = vextract.low.u32 %v241
    %v243 = vextract.high.u32 %v241
    %v244 = vmul.u32.u64.compose %v240, %v235
    %v245 = vextract.low.u32 %v244
    %v246 = vextract.high.u32 %v244
    %v247 = vmul.u32 %v240, %v231
    %v248 = vadd.s32 %v243, %v245
    %vm249 = vc.u32 %v243, %v245
    %v250 = vadd.s32 %v246, 1
    %v251 = vsel %vm249, %v250, %v246
    %v252 = vadd.s32 %v247, %v251
    %v253 = vadd.s32 %v252, 536870912
    %v254 = vshrl.u32 %v253, 30
    %v255 = vshll.u32 %v254, 30
    %v256 = vsub.s32 %v252, %v255
    %vm257 = vcmp.lt.s32.totalorder %v256, 0
    %v258 = vsub.s32 0, %v256
    %v259 = vsel %vm257, %v258, %v256
    %v260 = vclz %v259
    %v261 = vsub.s32 %v260, 2
    %vm262 = vcmp.gt.s32.totalorder 0, %v261
    %v263 = vsel %vm262, 0, %v261
    %v264 = vsub.s32 32, %v263
    %v265 = vshll.u32 %v256, %v263
    %v266 = vshrl.u32 %v248, %v264
    %v267 = vor.u32 %v265, %v266
    %v268 = vsub.s32 4294967266, %v263
    %v269 = vadd.s32 %v268, 127
    %v270 = vshll.u32 %v269, 23
    %v271 = vor.u32 4788187, %v270
    %v272 = vand.u32 2147483647, %v271
    %v274 = vcvt.s32.f32 %v267
    %v275 = vmul.f32 %v274, %v272
    %v276 = vxor.u32 %v275, 2147483648
    %v277 = vsel %vm194, %v276, %v275
    %v278 = vsub.s32 4, %v254
    %v279 = vsel %vm194, %v278, %v254
    %v280 = vsel %vm193, %v87, %v277
    %v281 = vsel %vm193, 0, %v279
    %v282 = vcosq.f32.pop %v280
    %v283 = vsinq.f32.pop %v280
    %vm284 = vweird.f32 %v87
    %v285 = vadd.s32 %v281, 3
    %v286 = vand.u32 %v285, 3
    %vm287 = vcmp.lt.s32.totalorder %v286, 2
    %vm288 = vcmp.eq.s32.totalorder %v286, 0
    %v289 = vxor.u32 %v283, 2147483648
    %v290 = vsel %vm288, %v282, %v289
    %vm291 = vcmp.eq.s32.totalorder %v286, 2
    %v292 = vxor.u32 %v282, 2147483648
    %v293 = vsel %vm291, %v292, %v283
    %v294 = vsel %vm287, %v290, %v293
    %v295 = vsel %vm284, nan, %v294
    %297 = vset.pattern.permute.xlu0 2
    %298 = vperm.xlu0 %297, %v66
    %v299 = vpop.permute.xlu0 %298
    %302 = vset.pattern.permute.xlu0 2
    %303 = vperm.xlu0 %302, %v67
    %v304 = vpop.permute.xlu0 %303
    %v306 = vmul.f32 %v299, %v191
    %v307 = vmul.f32 %v304, %v295
    %v308 = vadd.f32 %v64, %v306
    %v309 = vadd.f32 %v65, %v307
    %v310 = vld [vmem:[#allocation5] sm:$0xff]
    %v311 = vld [vmem:[#allocation5 + $0x8] sm:$0xff]
    %v312 = vld [vmem:[#allocation5 + $0x10] sm:$0xff]
    %v313 = vld [vmem:[#allocation5 + $0x18] sm:$0xff]
    %v314 = vld [vmem:[#allocation2 + $0x10] sm:$0xff]
    %v315 = vld [vmem:[#allocation2 + $0x18] sm:$0xff]
    %v316 = vld [vmem:[#allocation2 + $0x20] sm:$0xff]
    %v317 = vld [vmem:[#allocation2 + $0x28] sm:$0xff]
    %319 = vset.pattern.permute.xlu0 0
    %320 = vperm.xlu0 %319, %v314
    %v321 = vpop.permute.xlu0 %320
    %324 = vset.pattern.permute.xlu0 0
    %325 = vperm.xlu0 %324, %v315
    %v326 = vpop.permute.xlu0 %325
    %329 = vset.pattern.permute.xlu0 0
    %330 = vperm.xlu0 %329, %v316
    %v331 = vpop.permute.xlu0 %330
    %334 = vset.pattern.permute.xlu0 0
    %335 = vperm.xlu0 %334, %v317
    %v336 = vpop.permute.xlu0 %335
    %vm338 = vcmask 89088
    %v340 = vsel %vm338, %v310, 0
    %v343 = vsel %vm338, %v311, 0
    %v346 = vsel %vm338, %v312, 0
    %v349 = vsel %vm338, %v313, 0
    %vm351 = vcmask 1042432
    %v353 = vsel %vm351, %v309, 0
    %355 = vmatprep.subr.mxu0 0.0
    %356 = vmatpush1.msra.mxu0 0.0
    %357 = vmatprep.subr.mxu0 0.0
    %358 = vmatpush1.msra.mxu0 0.0
    %359 = vmatprep.subr.mxu0 0.0
    %360 = vmatpush1.msra.mxu0 0.0
    %361 = vmatprep.subr.mxu0 0.0
    %362 = vmatpush1.msra.mxu0 0.0
    %363 = vmatprep.subr.mxu0 0.0
    %364 = vmatpush1.msra.mxu0 0.0
    %365 = vmatprep.subr.mxu0 0.0
    %366 = vmatpush1.msra.mxu0 0.0
    %367 = vmatprep.subr.mxu0 0.0
    %368 = vmatpush1.msra.mxu0 0.0
    %369 = vmatprep.subr.mxu0 0.0
    %370 = vmatpush1.msra.mxu0 0.0
    %371 = vmatprep.subr.mxu0 0.0
    %372 = vmatpush1.msra.mxu0 0.0
    %373 = vmatprep.subr.mxu0 0.0
    %374 = vmatpush1.msra.mxu0 0.0
    %375 = vmatprep.subr.mxu0 0.0
    %376 = vmatpush1.msra.mxu0 0.0
    %377 = vmatprep.subr.mxu0 0.0
    %378 = vmatpush1.msra.mxu0 0.0
    %379 = vmatprep.subr.mxu0 0.0
    %380 = vmatpush1.msra.mxu0 0.0
    %381 = vmatprep.subr.mxu0 0.0
    %382 = vmatpush1.msra.mxu0 0.0
    %383 = vmatprep.subr.mxu0 0.0
    %384 = vmatpush1.msra.mxu0 %v353
    %385 = vmatprep.subr.mxu0 0.0
    %386 = vmatpush1.msra.mxu0 %v308
    %387 = vmatprep.subr.mxu0 0.0
    %388 = vmatpush2.msra.mxu0 0.0
    %389 = vmatprep.subr.mxu0 0.0
    %390 = vmatpush2.msra.mxu0 0.0
    %391 = vmatprep.subr.mxu0 0.0
    %392 = vmatpush2.msra.mxu0 0.0
    %393 = vmatprep.subr.mxu0 0.0
    %394 = vmatpush2.msra.mxu0 0.0
    %395 = vmatprep.subr.mxu0 0.0
    %396 = vmatpush2.msra.mxu0 0.0
    %397 = vmatprep.subr.mxu0 0.0
    %398 = vmatpush2.msra.mxu0 0.0
    %399 = vmatprep.subr.mxu0 0.0
    %400 = vmatpush2.msra.mxu0 0.0
    %401 = vmatprep.subr.mxu0 0.0
    %402 = vmatpush2.msra.mxu0 0.0
    %403 = vmatprep.subr.mxu0 0.0
    %404 = vmatpush2.msra.mxu0 0.0
    %405 = vmatprep.subr.mxu0 0.0
    %406 = vmatpush2.msra.mxu0 0.0
    %407 = vmatprep.subr.mxu0 0.0
    %408 = vmatpush2.msra.mxu0 0.0
    %409 = vmatprep.subr.mxu0 0.0
    %410 = vmatpush2.msra.mxu0 0.0
    %411 = vmatprep.subr.mxu0 0.0
    %412 = vmatpush2.msra.mxu0 0.0
    %413 = vmatprep.subr.mxu0 0.0
    %414 = vmatpush2.msra.mxu0 0.0
    %415 = vmatprep.subr.mxu0 0.0
    %416 = vmatpush2.msra.mxu0 0.0
    %417 = vmatprep.subr.mxu0 0.0
    %418 = vmatpush2.msra.mxu0 0.0
    %419 = vmatprep.mubr.f32.mxu0 0.0
    %420 = vmatmul.mubr.f32.gmra.mxu0 %v340
    %v421 = vpop.f32.mrf.mxu0
    %v422 = vadd.f32 %v321, %v421
    %v423 = vpop.f32.mrf.mxu0
    %424 = vmatprep.mubr.f32.mxu0 0.0
    %425 = vmatmul.mubr.f32.gmra.mxu0 %v343
    %v426 = vpop.f32.mrf.mxu0
    %v427 = vadd.f32 %v326, %v426
    %v428 = vpop.f32.mrf.mxu0
    %429 = vmatprep.mubr.f32.mxu0 0.0
    %430 = vmatmul.mubr.f32.gmra.mxu0 %v346
    %v431 = vpop.f32.mrf.mxu0
    %v432 = vadd.f32 %v331, %v431
    %v433 = vpop.f32.mrf.mxu0
    %434 = vmatprep.mubr.f32.mxu0 0.0
    %435 = vmatmul.mubr.f32.gmra.mxu0 %v349
    %v436 = vpop.f32.mrf.mxu0
    %v437 = vadd.f32 %v336, %v436
    %v438 = vpop.f32.mrf.mxu0
    %439 = vdwg.mxu0
    %v440 = vmax.f32 %v422, 0.0
    %v441 = vmax.f32 %v427, 0.0
    %v442 = vmax.f32 %v432, 0.0
    %v443 = vmax.f32 %v437, 0.0
    %v444 = vld [vmem:[#allocation5 + $0x20] sm:$0xff]
    %v445 = vld [vmem:[#allocation5 + $0x28] sm:$0xff]
    %v446 = vld [vmem:[#allocation5 + $0x30] sm:$0xff]
    %v447 = vld [vmem:[#allocation5 + $0x38] sm:$0xff]
    %448 = vset.pattern.permute.xlu0 1
    %449 = vperm.xlu0 %448, %v314
    %v450 = vpop.permute.xlu0 %449
    %452 = vset.pattern.permute.xlu0 1
    %453 = vperm.xlu0 %452, %v315
    %v454 = vpop.permute.xlu0 %453
    %456 = vset.pattern.permute.xlu0 1
    %457 = vperm.xlu0 %456, %v316
    %v458 = vpop.permute.xlu0 %457
    %460 = vset.pattern.permute.xlu0 1
    %461 = vperm.xlu0 %460, %v317
    %v462 = vpop.permute.xlu0 %461
    %vm464 = vcmask 261120
    %v466 = vsel %vm464, %v444, 0
    %v469 = vsel %vm464, %v445, 0
    %v472 = vsel %vm464, %v446, 0
    %v475 = vsel %vm464, %v447, 0
    %477 = vmatprep.subr.mxu0 0.0
    %478 = vmatpush1.msra.mxu0 0.0
    %479 = vmatprep.subr.mxu0 0.0
    %480 = vmatpush1.msra.mxu0 0.0
    %481 = vmatprep.subr.mxu0 0.0
    %482 = vmatpush1.msra.mxu0 0.0
    %483 = vmatprep.subr.mxu0 0.0
    %484 = vmatpush1.msra.mxu0 0.0
    %485 = vmatprep.subr.mxu0 0.0
    %486 = vmatpush1.msra.mxu0 0.0
    %487 = vmatprep.subr.mxu0 0.0
    %488 = vmatpush1.msra.mxu0 0.0
    %489 = vmatprep.subr.mxu0 0.0
    %490 = vmatpush1.msra.mxu0 0.0
    %491 = vmatprep.subr.mxu0 0.0
    %492 = vmatpush1.msra.mxu0 0.0
    %493 = vmatprep.subr.mxu0 0.0
    %494 = vmatpush1.msra.mxu0 0.0
    %495 = vmatprep.subr.mxu0 0.0
    %496 = vmatpush1.msra.mxu0 0.0
    %497 = vmatprep.subr.mxu0 0.0
    %498 = vmatpush1.msra.mxu0 0.0
    %499 = vmatprep.subr.mxu0 0.0
    %500 = vmatpush1.msra.mxu0 0.0
    %501 = vmatprep.subr.mxu0 0.0
    %502 = vmatpush1.msra.mxu0 %v443
    %503 = vmatprep.subr.mxu0 0.0
    %504 = vmatpush1.msra.mxu0 %v442
    %505 = vmatprep.subr.mxu0 0.0
    %506 = vmatpush1.msra.mxu0 %v441
    %507 = vmatprep.subr.mxu0 0.0
    %508 = vmatpush1.msra.mxu0 %v440
    %509 = vmatprep.subr.mxu0 0.0
    %510 = vmatpush2.msra.mxu0 0.0
    %511 = vmatprep.subr.mxu0 0.0
    %512 = vmatpush2.msra.mxu0 0.0
    %513 = vmatprep.subr.mxu0 0.0
    %514 = vmatpush2.msra.mxu0 0.0
    %515 = vmatprep.subr.mxu0 0.0
    %516 = vmatpush2.msra.mxu0 0.0
    %517 = vmatprep.subr.mxu0 0.0
    %518 = vmatpush2.msra.mxu0 0.0
    %519 = vmatprep.subr.mxu0 0.0
    %520 = vmatpush2.msra.mxu0 0.0
    %521 = vmatprep.subr.mxu0 0.0
    %522 = vmatpush2.msra.mxu0 0.0
    %523 = vmatprep.subr.mxu0 0.0
    %524 = vmatpush2.msra.mxu0 0.0
    %525 = vmatprep.subr.mxu0 0.0
    %526 = vmatpush2.msra.mxu0 0.0
    %527 = vmatprep.subr.mxu0 0.0
    %528 = vmatpush2.msra.mxu0 0.0
    %529 = vmatprep.subr.mxu0 0.0
    %530 = vmatpush2.msra.mxu0 0.0
    %531 = vmatprep.subr.mxu0 0.0
    %532 = vmatpush2.msra.mxu0 0.0
    %533 = vmatprep.subr.mxu0 0.0
    %534 = vmatpush2.msra.mxu0 0.0
    %535 = vmatprep.subr.mxu0 0.0
    %536 = vmatpush2.msra.mxu0 0.0
    %537 = vmatprep.subr.mxu0 0.0
    %538 = vmatpush2.msra.mxu0 0.0
    %539 = vmatprep.subr.mxu0 0.0
    %540 = vmatpush2.msra.mxu0 0.0
    %541 = vmatprep.mubr.f32.mxu0 0.0
    %542 = vmatmul.mubr.f32.gmra.mxu0 %v466
    %v543 = vpop.f32.mrf.mxu0
    %v544 = vadd.f32 %v450, %v543
    %v545 = vpop.f32.mrf.mxu0
    %546 = vmatprep.mubr.f32.mxu0 0.0
    %547 = vmatmul.mubr.f32.gmra.mxu0 %v469
    %v548 = vpop.f32.mrf.mxu0
    %v549 = vadd.f32 %v454, %v548
    %v550 = vpop.f32.mrf.mxu0
    %551 = vmatprep.mubr.f32.mxu0 0.0
    %552 = vmatmul.mubr.f32.gmra.mxu0 %v472
    %v553 = vpop.f32.mrf.mxu0
    %v554 = vadd.f32 %v458, %v553
    %v555 = vpop.f32.mrf.mxu0
    %556 = vmatprep.mubr.f32.mxu0 0.0
    %557 = vmatmul.mubr.f32.gmra.mxu0 %v475
    %v558 = vpop.f32.mrf.mxu0
    %v559 = vadd.f32 %v462, %v558
    %v560 = vpop.f32.mrf.mxu0
    %561 = vdwg.mxu0
    %v562 = vmax.f32 %v544, 0.0
    %v563 = vmax.f32 %v549, 0.0
    %v564 = vmax.f32 %v554, 0.0
    %v565 = vmax.f32 %v559, 0.0
    %v566 = vld [vmem:[#allocation5 + $0x40] sm:$0xff]
    %v567 = vld [vmem:[#allocation5 + $0x48] sm:$0xff]
    %v568 = vld [vmem:[#allocation5 + $0x50] sm:$0xff]
    %v569 = vld [vmem:[#allocation5 + $0x58] sm:$0xff]
    %574 = vrot.lane.b32.xlu0 %v566, 96
    %v575 = vpop.permute.xlu0 %574
    %576 = vrot.lane.b32.xlu0 %v567, 96
    %v577 = vpop.permute.xlu0 %576
    %578 = vrot.lane.b32.xlu0 %v568, 96
    %v579 = vpop.permute.xlu0 %578
    %580 = vrot.lane.b32.xlu0 %v569, 96
    %v581 = vpop.permute.xlu0 %580
    %v582 = vsel %vm338, %v575, 0
    %v584 = vsel %vm338, %v577, 0
    %v586 = vsel %vm338, %v579, 0
    %v588 = vsel %vm338, %v581, 0
    %590 = vmatprep.subr.mxu0 0.0
    %591 = vmatpush1.msra.mxu0 0.0
    %592 = vmatprep.subr.mxu0 0.0
    %593 = vmatpush1.msra.mxu0 0.0
    %594 = vmatprep.subr.mxu0 0.0
    %595 = vmatpush1.msra.mxu0 0.0
    %596 = vmatprep.subr.mxu0 0.0
    %597 = vmatpush1.msra.mxu0 0.0
    %598 = vmatprep.subr.mxu0 0.0
    %599 = vmatpush1.msra.mxu0 0.0
    %600 = vmatprep.subr.mxu0 0.0
    %601 = vmatpush1.msra.mxu0 0.0
    %602 = vmatprep.subr.mxu0 0.0
    %603 = vmatpush1.msra.mxu0 0.0
    %604 = vmatprep.subr.mxu0 0.0
    %605 = vmatpush1.msra.mxu0 0.0
    %606 = vmatprep.subr.mxu0 0.0
    %607 = vmatpush1.msra.mxu0 0.0
    %608 = vmatprep.subr.mxu0 0.0
    %609 = vmatpush1.msra.mxu0 0.0
    %610 = vmatprep.subr.mxu0 0.0
    %611 = vmatpush1.msra.mxu0 0.0
    %612 = vmatprep.subr.mxu0 0.0
    %613 = vmatpush1.msra.mxu0 0.0
    %614 = vmatprep.subr.mxu0 0.0
    %615 = vmatpush1.msra.mxu0 0.0
    %616 = vmatprep.subr.mxu0 0.0
    %617 = vmatpush1.msra.mxu0 0.0
    %618 = vmatprep.subr.mxu0 0.0
    %619 = vmatpush1.msra.mxu0 %v353
    %620 = vmatprep.subr.mxu0 0.0
    %621 = vmatpush1.msra.mxu0 %v308
    %622 = vmatprep.subr.mxu0 0.0
    %623 = vmatpush2.msra.mxu0 0.0
    %624 = vmatprep.subr.mxu0 0.0
    %625 = vmatpush2.msra.mxu0 0.0
    %626 = vmatprep.subr.mxu0 0.0
    %627 = vmatpush2.msra.mxu0 0.0
    %628 = vmatprep.subr.mxu0 0.0
    %629 = vmatpush2.msra.mxu0 0.0
    %630 = vmatprep.subr.mxu0 0.0
    %631 = vmatpush2.msra.mxu0 0.0
    %632 = vmatprep.subr.mxu0 0.0
    %633 = vmatpush2.msra.mxu0 0.0
    %634 = vmatprep.subr.mxu0 0.0
    %635 = vmatpush2.msra.mxu0 0.0
    %636 = vmatprep.subr.mxu0 0.0
    %637 = vmatpush2.msra.mxu0 0.0
    %638 = vmatprep.subr.mxu0 0.0
    %639 = vmatpush2.msra.mxu0 0.0
    %640 = vmatprep.subr.mxu0 0.0
    %641 = vmatpush2.msra.mxu0 0.0
    %642 = vmatprep.subr.mxu0 0.0
    %643 = vmatpush2.msra.mxu0 0.0
    %644 = vmatprep.subr.mxu0 0.0
    %645 = vmatpush2.msra.mxu0 0.0
    %646 = vmatprep.subr.mxu0 0.0
    %647 = vmatpush2.msra.mxu0 0.0
    %648 = vmatprep.subr.mxu0 0.0
    %649 = vmatpush2.msra.mxu0 0.0
    %650 = vmatprep.subr.mxu0 0.0
    %651 = vmatpush2.msra.mxu0 0.0
    %652 = vmatprep.subr.mxu0 0.0
    %653 = vmatpush2.msra.mxu0 0.0
    %654 = vmatprep.mubr.f32.mxu0 0.0
    %655 = vmatmul.mubr.f32.gmra.mxu0 %v582
    %v656 = vpop.f32.mrf.mxu0
    %v657 = vadd.f32 0.0, %v656
    %v658 = vpop.f32.mrf.mxu0
    %659 = vmatprep.mubr.f32.mxu0 0.0
    %660 = vmatmul.mubr.f32.gmra.mxu0 %v584
    %v661 = vpop.f32.mrf.mxu0
    %v662 = vadd.f32 0.0, %v661
    %v663 = vpop.f32.mrf.mxu0
    %664 = vmatprep.mubr.f32.mxu0 0.0
    %665 = vmatmul.mubr.f32.gmra.mxu0 %v586
    %v666 = vpop.f32.mrf.mxu0
    %v667 = vadd.f32 0.0, %v666
    %v668 = vpop.f32.mrf.mxu0
    %669 = vmatprep.mubr.f32.mxu0 0.0
    %670 = vmatmul.mubr.f32.gmra.mxu0 %v588
    %v671 = vpop.f32.mrf.mxu0
    %v672 = vadd.f32 0.0, %v671
    %v673 = vpop.f32.mrf.mxu0
    %674 = vdwg.mxu0
    %v675 = vsel %vm464, %v566, 0
    %v677 = vsel %vm464, %v567, 0
    %v679 = vsel %vm464, %v568, 0
    %v681 = vsel %vm464, %v569, 0
    %683 = vmatprep.subr.mxu0 0.0
    %684 = vmatpush1.msra.mxu0 0.0
    %685 = vmatprep.subr.mxu0 0.0
    %686 = vmatpush1.msra.mxu0 0.0
    %687 = vmatprep.subr.mxu0 0.0
    %688 = vmatpush1.msra.mxu0 0.0
    %689 = vmatprep.subr.mxu0 0.0
    %690 = vmatpush1.msra.mxu0 0.0
    %691 = vmatprep.subr.mxu0 0.0
    %692 = vmatpush1.msra.mxu0 0.0
    %693 = vmatprep.subr.mxu0 0.0
    %694 = vmatpush1.msra.mxu0 0.0
    %695 = vmatprep.subr.mxu0 0.0
    %696 = vmatpush1.msra.mxu0 0.0
    %697 = vmatprep.subr.mxu0 0.0
    %698 = vmatpush1.msra.mxu0 0.0
    %699 = vmatprep.subr.mxu0 0.0
    %700 = vmatpush1.msra.mxu0 0.0
    %701 = vmatprep.subr.mxu0 0.0
    %702 = vmatpush1.msra.mxu0 0.0
    %703 = vmatprep.subr.mxu0 0.0
    %704 = vmatpush1.msra.mxu0 0.0
    %705 = vmatprep.subr.mxu0 0.0
    %706 = vmatpush1.msra.mxu0 0.0
    %707 = vmatprep.subr.mxu0 0.0
    %708 = vmatpush1.msra.mxu0 %v565
    %709 = vmatprep.subr.mxu0 0.0
    %710 = vmatpush1.msra.mxu0 %v564
    %711 = vmatprep.subr.mxu0 0.0
    %712 = vmatpush1.msra.mxu0 %v563
    %713 = vmatprep.subr.mxu0 0.0
    %714 = vmatpush1.msra.mxu0 %v562
    %715 = vmatprep.subr.mxu0 0.0
    %716 = vmatpush2.msra.mxu0 0.0
    %717 = vmatprep.subr.mxu0 0.0
    %718 = vmatpush2.msra.mxu0 0.0
    %719 = vmatprep.subr.mxu0 0.0
    %720 = vmatpush2.msra.mxu0 0.0
    %721 = vmatprep.subr.mxu0 0.0
    %722 = vmatpush2.msra.mxu0 0.0
    %723 = vmatprep.subr.mxu0 0.0
    %724 = vmatpush2.msra.mxu0 0.0
    %725 = vmatprep.subr.mxu0 0.0
    %726 = vmatpush2.msra.mxu0 0.0
    %727 = vmatprep.subr.mxu0 0.0
    %728 = vmatpush2.msra.mxu0 0.0
    %729 = vmatprep.subr.mxu0 0.0
    %730 = vmatpush2.msra.mxu0 0.0
    %731 = vmatprep.subr.mxu0 0.0
    %732 = vmatpush2.msra.mxu0 0.0
    %733 = vmatprep.subr.mxu0 0.0
    %734 = vmatpush2.msra.mxu0 0.0
    %735 = vmatprep.subr.mxu0 0.0
    %736 = vmatpush2.msra.mxu0 0.0
    %737 = vmatprep.subr.mxu0 0.0
    %738 = vmatpush2.msra.mxu0 0.0
    %739 = vmatprep.subr.mxu0 0.0
    %740 = vmatpush2.msra.mxu0 0.0
    %741 = vmatprep.subr.mxu0 0.0
    %742 = vmatpush2.msra.mxu0 0.0
    %743 = vmatprep.subr.mxu0 0.0
    %744 = vmatpush2.msra.mxu0 0.0
    %745 = vmatprep.subr.mxu0 0.0
    %746 = vmatpush2.msra.mxu0 0.0
    %747 = vmatprep.mubr.f32.mxu0 0.0
    %748 = vmatmul.mubr.f32.gmra.mxu0 %v675
    %v749 = vpop.f32.mrf.mxu0
    %v750 = vadd.f32 %v657, %v749
    %v751 = vpop.f32.mrf.mxu0
    %752 = vmatprep.mubr.f32.mxu0 0.0
    %753 = vmatmul.mubr.f32.gmra.mxu0 %v677
    %v754 = vpop.f32.mrf.mxu0
    %v755 = vadd.f32 %v662, %v754
    %v756 = vpop.f32.mrf.mxu0
    %757 = vmatprep.mubr.f32.mxu0 0.0
    %758 = vmatmul.mubr.f32.gmra.mxu0 %v679
    %v759 = vpop.f32.mrf.mxu0
    %v760 = vadd.f32 %v667, %v759
    %v761 = vpop.f32.mrf.mxu0
    %762 = vmatprep.mubr.f32.mxu0 0.0
    %763 = vmatmul.mubr.f32.gmra.mxu0 %v681
    %v764 = vpop.f32.mrf.mxu0
    %v765 = vadd.f32 %v672, %v764
    %v766 = vpop.f32.mrf.mxu0
    %767 = vdwg.mxu0
    %768 = vset.pattern.permute.xlu0 2
    %769 = vperm.xlu0 %768, %v314
    %v770 = vpop.permute.xlu0 %769
    %772 = vset.pattern.permute.xlu0 2
    %773 = vperm.xlu0 %772, %v315
    %v774 = vpop.permute.xlu0 %773
    %776 = vset.pattern.permute.xlu0 2
    %777 = vperm.xlu0 %776, %v316
    %v778 = vpop.permute.xlu0 %777
    %780 = vset.pattern.permute.xlu0 2
    %781 = vperm.xlu0 %780, %v317
    %v782 = vpop.permute.xlu0 %781
    %v784 = vadd.f32 %v750, %v770
    %v785 = vadd.f32 %v755, %v774
    %v786 = vadd.f32 %v760, %v778
    %v787 = vadd.f32 %v765, %v782
    %v788 = vmax.f32 %v784, 0.0
    %v789 = vmax.f32 %v785, 0.0
    %v790 = vmax.f32 %v786, 0.0
    %v791 = vmax.f32 %v787, 0.0
    %v792 = vld [vmem:[#allocation5 + $0x60] sm:$0xff]
    %v793 = vld [vmem:[#allocation5 + $0x68] sm:$0xff]
    %v794 = vld [vmem:[#allocation5 + $0x70] sm:$0xff]
    %v795 = vld [vmem:[#allocation5 + $0x78] sm:$0xff]
    %796 = vset.pattern.permute.xlu0 3
    %797 = vperm.xlu0 %796, %v314
    %v798 = vpop.permute.xlu0 %797
    %800 = vset.pattern.permute.xlu0 3
    %801 = vperm.xlu0 %800, %v315
    %v802 = vpop.permute.xlu0 %801
    %804 = vset.pattern.permute.xlu0 3
    %805 = vperm.xlu0 %804, %v316
    %v806 = vpop.permute.xlu0 %805
    %808 = vset.pattern.permute.xlu0 3
    %809 = vperm.xlu0 %808, %v317
    %v810 = vpop.permute.xlu0 %809
    %v813 = vsel %vm464, %v792, 0
    %v816 = vsel %vm464, %v793, 0
    %v819 = vsel %vm464, %v794, 0
    %v822 = vsel %vm464, %v795, 0
    %824 = vmatprep.subr.mxu0 0.0
    %825 = vmatpush1.msra.mxu0 0.0
    %826 = vmatprep.subr.mxu0 0.0
    %827 = vmatpush1.msra.mxu0 0.0
    %828 = vmatprep.subr.mxu0 0.0
    %829 = vmatpush1.msra.mxu0 0.0
    %830 = vmatprep.subr.mxu0 0.0
    %831 = vmatpush1.msra.mxu0 0.0
    %832 = vmatprep.subr.mxu0 0.0
    %833 = vmatpush1.msra.mxu0 0.0
    %834 = vmatprep.subr.mxu0 0.0
    %835 = vmatpush1.msra.mxu0 0.0
    %836 = vmatprep.subr.mxu0 0.0
    %837 = vmatpush1.msra.mxu0 0.0
    %838 = vmatprep.subr.mxu0 0.0
    %839 = vmatpush1.msra.mxu0 0.0
    %840 = vmatprep.subr.mxu0 0.0
    %841 = vmatpush1.msra.mxu0 0.0
    %842 = vmatprep.subr.mxu0 0.0
    %843 = vmatpush1.msra.mxu0 0.0
    %844 = vmatprep.subr.mxu0 0.0
    %845 = vmatpush1.msra.mxu0 0.0
    %846 = vmatprep.subr.mxu0 0.0
    %847 = vmatpush1.msra.mxu0 0.0
    %848 = vmatprep.subr.mxu0 0.0
    %849 = vmatpush1.msra.mxu0 %v791
    %850 = vmatprep.subr.mxu0 0.0
    %851 = vmatpush1.msra.mxu0 %v790
    %852 = vmatprep.subr.mxu0 0.0
    %853 = vmatpush1.msra.mxu0 %v789
    %854 = vmatprep.subr.mxu0 0.0
    %855 = vmatpush1.msra.mxu0 %v788
    %856 = vmatprep.subr.mxu0 0.0
    %857 = vmatpush2.msra.mxu0 0.0
    %858 = vmatprep.subr.mxu0 0.0
    %859 = vmatpush2.msra.mxu0 0.0
    %860 = vmatprep.subr.mxu0 0.0
    %861 = vmatpush2.msra.mxu0 0.0
    %862 = vmatprep.subr.mxu0 0.0
    %863 = vmatpush2.msra.mxu0 0.0
    %864 = vmatprep.subr.mxu0 0.0
    %865 = vmatpush2.msra.mxu0 0.0
    %866 = vmatprep.subr.mxu0 0.0
    %867 = vmatpush2.msra.mxu0 0.0
    %868 = vmatprep.subr.mxu0 0.0
    %869 = vmatpush2.msra.mxu0 0.0
    %870 = vmatprep.subr.mxu0 0.0
    %871 = vmatpush2.msra.mxu0 0.0
    %872 = vmatprep.subr.mxu0 0.0
    %873 = vmatpush2.msra.mxu0 0.0
    %874 = vmatprep.subr.mxu0 0.0
    %875 = vmatpush2.msra.mxu0 0.0
    %876 = vmatprep.subr.mxu0 0.0
    %877 = vmatpush2.msra.mxu0 0.0
    %878 = vmatprep.subr.mxu0 0.0
    %879 = vmatpush2.msra.mxu0 0.0
    %880 = vmatprep.subr.mxu0 0.0
    %881 = vmatpush2.msra.mxu0 0.0
    %882 = vmatprep.subr.mxu0 0.0
    %883 = vmatpush2.msra.mxu0 0.0
    %884 = vmatprep.subr.mxu0 0.0
    %885 = vmatpush2.msra.mxu0 0.0
    %886 = vmatprep.subr.mxu0 0.0
    %887 = vmatpush2.msra.mxu0 0.0
    %888 = vmatprep.mubr.f32.mxu0 0.0
    %889 = vmatmul.mubr.f32.gmra.mxu0 %v813
    %v890 = vpop.f32.mrf.mxu0
    %v891 = vadd.f32 %v798, %v890
    %v892 = vpop.f32.mrf.mxu0
    %893 = vmatprep.mubr.f32.mxu0 0.0
    %894 = vmatmul.mubr.f32.gmra.mxu0 %v816
    %v895 = vpop.f32.mrf.mxu0
    %v896 = vadd.f32 %v802, %v895
    %v897 = vpop.f32.mrf.mxu0
    %898 = vmatprep.mubr.f32.mxu0 0.0
    %899 = vmatmul.mubr.f32.gmra.mxu0 %v819
    %v900 = vpop.f32.mrf.mxu0
    %v901 = vadd.f32 %v806, %v900
    %v902 = vpop.f32.mrf.mxu0
    %903 = vmatprep.mubr.f32.mxu0 0.0
    %904 = vmatmul.mubr.f32.gmra.mxu0 %v822
    %v905 = vpop.f32.mrf.mxu0
    %v906 = vadd.f32 %v810, %v905
    %v907 = vpop.f32.mrf.mxu0
    %908 = vdwg.mxu0
    %v909 = vmax.f32 %v891, 0.0
    %v910 = vmax.f32 %v896, 0.0
    %v911 = vmax.f32 %v901, 0.0
    %v912 = vmax.f32 %v906, 0.0
    %v913 = vld [vmem:[#allocation2 + $0x30] sm:$0xff]
    %v914 = vld [vmem:[#allocation2 + $0x10] sm:$0xff]
    %916 = vset.pattern.permute.xlu0 4
    %917 = vperm.xlu0 %916, %v914
    %v918 = vpop.permute.xlu0 %917
    %v921 = vsel %vm464, %v913, 0
    %923 = vmatprep.subr.mxu0 0.0
    %924 = vmatpush1.msra.mxu0 0.0
    %925 = vmatprep.subr.mxu0 0.0
    %926 = vmatpush1.msra.mxu0 0.0
    %927 = vmatprep.subr.mxu0 0.0
    %928 = vmatpush1.msra.mxu0 0.0
    %929 = vmatprep.subr.mxu0 0.0
    %930 = vmatpush1.msra.mxu0 0.0
    %931 = vmatprep.subr.mxu0 0.0
    %932 = vmatpush1.msra.mxu0 0.0
    %933 = vmatprep.subr.mxu0 0.0
    %934 = vmatpush1.msra.mxu0 0.0
    %935 = vmatprep.subr.mxu0 0.0
    %936 = vmatpush1.msra.mxu0 0.0
    %937 = vmatprep.subr.mxu0 0.0
    %938 = vmatpush1.msra.mxu0 0.0
    %939 = vmatprep.subr.mxu0 0.0
    %940 = vmatpush1.msra.mxu0 0.0
    %941 = vmatprep.subr.mxu0 0.0
    %942 = vmatpush1.msra.mxu0 0.0
    %943 = vmatprep.subr.mxu0 0.0
    %944 = vmatpush1.msra.mxu0 0.0
    %945 = vmatprep.subr.mxu0 0.0
    %946 = vmatpush1.msra.mxu0 0.0
    %947 = vmatprep.subr.mxu0 0.0
    %948 = vmatpush1.msra.mxu0 %v912
    %949 = vmatprep.subr.mxu0 0.0
    %950 = vmatpush1.msra.mxu0 %v911
    %951 = vmatprep.subr.mxu0 0.0
    %952 = vmatpush1.msra.mxu0 %v910
    %953 = vmatprep.subr.mxu0 0.0
    %954 = vmatpush1.msra.mxu0 %v909
    %955 = vmatprep.subr.mxu0 0.0
    %956 = vmatpush2.msra.mxu0 0.0
    %957 = vmatprep.subr.mxu0 0.0
    %958 = vmatpush2.msra.mxu0 0.0
    %959 = vmatprep.subr.mxu0 0.0
    %960 = vmatpush2.msra.mxu0 0.0
    %961 = vmatprep.subr.mxu0 0.0
    %962 = vmatpush2.msra.mxu0 0.0
    %963 = vmatprep.subr.mxu0 0.0
    %964 = vmatpush2.msra.mxu0 0.0
    %965 = vmatprep.subr.mxu0 0.0
    %966 = vmatpush2.msra.mxu0 0.0
    %967 = vmatprep.subr.mxu0 0.0
    %968 = vmatpush2.msra.mxu0 0.0
    %969 = vmatprep.subr.mxu0 0.0
    %970 = vmatpush2.msra.mxu0 0.0
    %971 = vmatprep.subr.mxu0 0.0
    %972 = vmatpush2.msra.mxu0 0.0
    %973 = vmatprep.subr.mxu0 0.0
    %974 = vmatpush2.msra.mxu0 0.0
    %975 = vmatprep.subr.mxu0 0.0
    %976 = vmatpush2.msra.mxu0 0.0
    %977 = vmatprep.subr.mxu0 0.0
    %978 = vmatpush2.msra.mxu0 0.0
    %979 = vmatprep.subr.mxu0 0.0
    %980 = vmatpush2.msra.mxu0 0.0
    %981 = vmatprep.subr.mxu0 0.0
    %982 = vmatpush2.msra.mxu0 0.0
    %983 = vmatprep.subr.mxu0 0.0
    %984 = vmatpush2.msra.mxu0 0.0
    %985 = vmatprep.subr.mxu0 0.0
    %986 = vmatpush2.msra.mxu0 0.0
    %987 = vmatprep.mubr.f32.mxu0 0.0
    %988 = vmatmul.mubr.f32.gmra.mxu0 %v921
    %v989 = vpop.f32.mrf.mxu0
    %v990 = vadd.f32 %v918, %v989
    %v991 = vpop.f32.mrf.mxu0
    %992 = vdwg.mxu0
    %993 = vst [vmem:[#allocation7] sm:$0xff] %v990
    // Predicated region
    $region22: #{tpu_custom_call.1} parent=1 // pred_check
      _
    $region23: #{tpu_custom_call.1} parent=1 // pred_check_branch
      %995 = sbr.rel (0) target = $region25
    $region24: #{tpu_custom_call.1} parent=1 // pred_region
      %s997 = ssub.s32 128, 128
      %998 = vsyncadd [#allocation4], %s997
      %s1000 = sshll.u32 [#allocation7], 4
      %s1001 = int_to_ptr.vmem [resolvable:$true] %s1000
      %1003 = dma.vmem_to_hbm [thread:$0]  %s1001, 128, %s3, [#allocation4]
    $region25: #{tpu_custom_call.1} parent=1 // pred_fallthru
      _
    // Predicated region
    $region26: #{tpu_custom_call.1} parent=1 // pred_check
      _
    $region27: #{tpu_custom_call.1} parent=1 // pred_check_branch
      %1005 = sbr.rel (0) target = $region29
    $region28: #{tpu_custom_call.1} parent=1 // pred_region
      %1006 = dma.done [#allocation4], 128
    $region29: #{tpu_custom_call.1} parent=1 // pred_fallthru
      _
    %1007 = vsyncpa [#allocation3], 1
    %1008 = vsyncpa [#allocation6], 1
    %1009 = vsyncpa [#allocation4], 1

</llo_original>
